<compile_context>
chip_gen: v6e
topology: v6e:2x2x1
jax: 0.10.0
libtpu: 0.0.40
codegen_flags: <defaults>
</compile_context>

<pallas_src>
import jax
import jax.numpy as jnp
from jax.experimental import pallas as pl
from jax.experimental.pallas import tpu as pltpu

# ----------------------------- SH encoding ---------------------------------
C0 = 0.28209479177387814
C1 = 0.4886025119029199
C2 = (1.0925484305920792, -1.0925484305920792, 0.31539156525252005,
      -1.0925484305920792, 0.5462742152960396)
C3 = (-0.5900435899266435, 2.890611442640554, -0.4570457994644658,
      0.3731763325901154, -0.4570457994644658, 1.445305721320277,
      -0.5900435899266435)

SH_OUTPUT_CH = 16  # degree 4


def _sh_encode_t(v):
    """v: [3, n] (channels-first) -> [16, n] SH basis. Lane-dense elementwise."""
    x = v[0:1, :]
    y = v[1:2, :]
    z = v[2:3, :]
    xx, yy, zz = x * x, y * y, z * z
    xy, yz, xz = x * y, y * z, x * z
    comps = [
        jnp.full_like(x, C0),
        -C1 * y,
        C1 * z,
        -C1 * x,
        C2[0] * xy,
        C2[1] * yz,
        C2[2] * (2.0 * zz - xx - yy),
        C2[3] * xz,
        C2[4] * (xx - yy),
        C3[0] * y * (3.0 * xx - yy),
        C3[1] * xy * z,
        C3[2] * y * (4.0 * zz - xx - yy),
        C3[3] * z * (2.0 * zz - 3.0 * xx - 3.0 * yy),
        C3[4] * x * (4.0 * zz - xx - yy),
        C3[5] * z * (xx - yy),
        C3[6] * x * (xx - 3.0 * yy),
    ]
    # Cheap sublane stacking (16 rows), no lane-axis concat.
    return jnp.concatenate(comps, axis=0)


# ----------------------------- Pallas kernel --------------------------------
def color_sh_kernel(geo_ref, views_ref, *rest):
    """rest = (w1_geo_t, w1_sh_t, *hidden_t, w_out_t, out_ref).

    All operands are channels-first: geo [G, tile_n], views [3, tile_n],
    weights [out_ch, in_ch], output [3, tile_n].
    """
    *w_refs, o_ref = rest
    w1g_ref, w1s_ref = w_refs[0], w_refs[1]
    hidden_refs = w_refs[2:-1]
    w_out_ref = w_refs[-1]

    # SH-encode the view directions: [16, tile_n], full-lane VPU work.
    sh = _sh_encode_t(views_ref[...])

    # First layer: split matmul replaces the channel-axis concatenate.
    h = (jnp.dot(w1g_ref[...], geo_ref[...], preferred_element_type=jnp.float32)
         + jnp.dot(w1s_ref[...], sh, preferred_element_type=jnp.float32))
    h = jnp.maximum(h, 0.0)

    # Remaining hidden layers: Linear (bias=False) + ReLU.
    for w_ref in hidden_refs:
        h = jnp.maximum(
            jnp.dot(w_ref[...], h, preferred_element_type=jnp.float32), 0.0)

    # Output layer: Linear (bias=False), no activation, then sigmoid.
    out = jnp.dot(w_out_ref[...], h, preferred_element_type=jnp.float32)
    o_ref[...] = jax.nn.sigmoid(out).astype(o_ref.dtype)


def _round_up(x, m):
    return ((x + m - 1) // m) * m


def color_sh_forward(geo_features, views, weights, *, tile_n=2048):
    """geo_features: [N, G] f32, views: [N, 3] f32.

    weights: row-major Linear matrices matching `h @ W` semantics:
      [ (G+16, W), (W, W) x (D-1), (W, 3) ], all bias-free.
    Returns sigmoid(MLP(concat(geo, SH(views)))) : [N, 3].
    """
    N, G = geo_features.shape
    dtype = geo_features.dtype

    # Large lane-dense row tiles; clamp so tiny inputs aren't over-padded.
    tile_n = max(128, min(tile_n, _round_up(N, 128)))
    n_pad = _round_up(N, tile_n)

    # Channels-on-sublanes layout: features along sublanes, rows along lanes.
    geo_t = jnp.zeros((G, n_pad), dtype).at[:, :N].set(geo_features.T)
    views_t = jnp.zeros((3, n_pad), dtype).at[:, :N].set(views.T)

    # Pre-transpose weights (out_ch first) and split layer 1 so the kernel
    # never concatenates geo with SH along the channel axis.
    w1 = weights[0]
    w1g_t = jnp.asarray(w1[:G].T)             # [W, G]
    w1s_t = jnp.asarray(w1[G:].T)             # [W, 16]
    hidden_t = [jnp.asarray(w.T) for w in weights[1:-1]]   # [W, W] each
    w_out_t = jnp.asarray(weights[-1].T)      # [3, W]
    kernel_weights = [w1g_t, w1s_t] + hidden_t + [w_out_t]

    in_specs = [
        pl.BlockSpec((G, tile_n), lambda i: (0, i)),   # geo tile
        pl.BlockSpec((3, tile_n), lambda i: (0, i)),   # views tile
    ]
    # Weights are tiny: keep each fully resident for every grid step.
    for w in kernel_weights:
        in_specs.append(pl.BlockSpec(w.shape, lambda i: (0, 0)))

    out_t = pl.pallas_call(
        color_sh_kernel,
        out_shape=jax.ShapeDtypeStruct((3, n_pad), dtype),
        grid_spec=pltpu.PrefetchScalarGridSpec(
            num_scalar_prefetch=0,
            grid=(n_pad // tile_n,),
            in_specs=in_specs,
            out_specs=pl.BlockSpec((3, tile_n), lambda i: (0, i)),
        ),
        compiler_params=pltpu.CompilerParams(
            dimension_semantics=("parallel",)),
    )(geo_t, views_t, *kernel_weights)

    # Wrapper-side layout plumbing back to the module's [N, 3] convention.
    return out_t[:, :N].T


# ----------------------------- reference (pure JAX) -------------------------
def color_sh_reference(geo_features, views, weights):
    sh = _sh_encode_t(views.T).T
    h = jnp.concatenate([geo_features, sh], axis=-1)
    for w in weights[:-1]:
        h = jnp.maximum(h @ w, 0.0)
    return jax.nn.sigmoid(h @ weights[-1])


# ----------------------------- main -----------------------------------------
if __name__ == "__main__":
    # Module hyperparameters (small, consistent with ColorSH.__init__).
    N_degree = 4          # SH degree (encoder output_ch = 16)
    N_geo_emb = 16        # geometry-embedding channels
    D, W = 2, 32          # MLP: 2 hidden layers of width 32
    N = 200               # number of rays / rows (exercises padded remainder)
    input_ch = SH_OUTPUT_CH + N_geo_emb  # 32

    key = jax.random.PRNGKey(0)
    k_geo, k_view, k_w = jax.random.split(key, 3)

    geo_features = jax.random.normal(k_geo, (N, N_geo_emb), dtype=jnp.float32)
    views = jax.random.normal(k_view, (N, 3), dtype=jnp.float32)
    views = views / jnp.linalg.norm(views, axis=-1, keepdims=True)

    # Deterministic bias-free MLP weights: Linear(input_ch, W),
    # (D-1) x Linear(W, W), Linear(W, 3).
    weight_shapes = [(input_ch, W)] + [(W, W)] * (D - 1) + [(W, 3)]
    w_keys = jax.random.split(k_w, len(weight_shapes))
    weights = [
        0.1 * jax.random.normal(wk, shp, dtype=jnp.float32)
        for wk, shp in zip(w_keys, weight_shapes)
    ]

    out = color_sh_forward(geo_features, views, weights, tile_n=2048)
    out = jax.block_until_ready(out)

    ref = color_sh_reference(geo_features, views, weights)
    assert out.shape == (N, 3)
    assert jnp.allclose(out, ref, atol=1e-5, rtol=1e-5), "mismatch vs reference"

    print("KERNEL_OK")
</pallas_src>

<mosaic_0001>
module attributes {stable_mosaic.version = 11 : i64} {
  func.func @color_sh_kernel(%arg0: i32, %arg1: memref<16x256xf32, #tpu.memory_space<vmem>>, %arg2: memref<3x256xf32, #tpu.memory_space<vmem>>, %arg3: memref<32x16xf32, #tpu.memory_space<vmem>>, %arg4: memref<32x16xf32, #tpu.memory_space<vmem>>, %arg5: memref<32x32xf32, #tpu.memory_space<vmem>>, %arg6: memref<3x32xf32, #tpu.memory_space<vmem>>, %arg7: memref<3x256xf32, #tpu.memory_space<vmem>>) attributes {dimension_semantics = [#tpu.dimension_semantics<parallel>], iteration_bounds = array<i64: 1>, scalar_prefetch = 0 : i64, scratch_operands = 0 : i64, tpu.core_type = #tpu.core_type<tc>, window_params = [{transform_indices = @transform_0, window_bounds = array<i64: 16, 256>}, {transform_indices = @transform_1, window_bounds = array<i64: 3, 256>}, {pipeline_mode = #tpu.pipeline_mode<synchronous>, transform_indices = @transform_2, window_bounds = array<i64: 32, 16>}, {pipeline_mode = #tpu.pipeline_mode<synchronous>, transform_indices = @transform_3, window_bounds = array<i64: 32, 16>}, {pipeline_mode = #tpu.pipeline_mode<synchronous>, transform_indices = @transform_4, window_bounds = array<i64: 32, 32>}, {pipeline_mode = #tpu.pipeline_mode<synchronous>, transform_indices = @transform_5, window_bounds = array<i64: 3, 32>}, {transform_indices = @transform_6, window_bounds = array<i64: 3, 256>}]} {
    %c0 = arith.constant 0 : index
    %c0_0 = arith.constant 0 : index
    %0 = vector.load %arg2[%c0, %c0_0] : memref<3x256xf32, #tpu.memory_space<vmem>>, vector<3x256xf32>
    %1 = vector.extract_strided_slice %0 {offsets = [0, 0], sizes = [1, 256], strides = [1, 1]} : vector<3x256xf32> to vector<1x256xf32>
    %2 = vector.extract_strided_slice %0 {offsets = [1, 0], sizes = [1, 256], strides = [1, 1]} : vector<3x256xf32> to vector<1x256xf32>
    %3 = vector.extract_strided_slice %0 {offsets = [2, 0], sizes = [1, 256], strides = [1, 1]} : vector<3x256xf32> to vector<1x256xf32>
    %4 = arith.mulf %1, %1 : vector<1x256xf32>
    %5 = arith.mulf %2, %2 : vector<1x256xf32>
    %6 = arith.mulf %3, %3 : vector<1x256xf32>
    %7 = arith.mulf %1, %2 : vector<1x256xf32>
    %8 = arith.mulf %2, %3 : vector<1x256xf32>
    %9 = arith.mulf %1, %3 : vector<1x256xf32>
    %cst = arith.constant 0.282094806 : f32
    %10 = vector.broadcast %cst : f32 to vector<1x256xf32>
    %cst_1 = arith.constant -0.488602519 : f32
    %11 = vector.broadcast %cst_1 : f32 to vector<1x256xf32>
    %12 = arith.mulf %11, %2 : vector<1x256xf32>
    %cst_2 = arith.constant 0.488602519 : f32
    %13 = vector.broadcast %cst_2 : f32 to vector<1x256xf32>
    %14 = arith.mulf %13, %3 : vector<1x256xf32>
    %cst_3 = arith.constant -0.488602519 : f32
    %15 = vector.broadcast %cst_3 : f32 to vector<1x256xf32>
    %16 = arith.mulf %15, %1 : vector<1x256xf32>
    %cst_4 = arith.constant 1.09254849 : f32
    %17 = vector.broadcast %cst_4 : f32 to vector<1x256xf32>
    %18 = arith.mulf %17, %7 : vector<1x256xf32>
    %cst_5 = arith.constant -1.09254849 : f32
    %19 = vector.broadcast %cst_5 : f32 to vector<1x256xf32>
    %20 = arith.mulf %19, %8 : vector<1x256xf32>
    %cst_6 = arith.constant 2.000000e+00 : f32
    %21 = vector.broadcast %cst_6 : f32 to vector<1x256xf32>
    %22 = arith.mulf %21, %6 : vector<1x256xf32>
    %23 = arith.subf %22, %4 : vector<1x256xf32>
    %24 = arith.subf %23, %5 : vector<1x256xf32>
    %cst_7 = arith.constant 0.31539157 : f32
    %25 = vector.broadcast %cst_7 : f32 to vector<1x256xf32>
    %26 = arith.mulf %25, %24 : vector<1x256xf32>
    %cst_8 = arith.constant -1.09254849 : f32
    %27 = vector.broadcast %cst_8 : f32 to vector<1x256xf32>
    %28 = arith.mulf %27, %9 : vector<1x256xf32>
    %29 = arith.subf %4, %5 : vector<1x256xf32>
    %cst_9 = arith.constant 0.546274245 : f32
    %30 = vector.broadcast %cst_9 : f32 to vector<1x256xf32>
    %31 = arith.mulf %30, %29 : vector<1x256xf32>
    %cst_10 = arith.constant -0.590043604 : f32
    %32 = vector.broadcast %cst_10 : f32 to vector<1x256xf32>
    %33 = arith.mulf %32, %2 : vector<1x256xf32>
    %cst_11 = arith.constant 3.000000e+00 : f32
    %34 = vector.broadcast %cst_11 : f32 to vector<1x256xf32>
    %35 = arith.mulf %34, %4 : vector<1x256xf32>
    %36 = arith.subf %35, %5 : vector<1x256xf32>
    %37 = arith.mulf %33, %36 : vector<1x256xf32>
    %cst_12 = arith.constant 2.89061141 : f32
    %38 = vector.broadcast %cst_12 : f32 to vector<1x256xf32>
    %39 = arith.mulf %38, %7 : vector<1x256xf32>
    %40 = arith.mulf %39, %3 : vector<1x256xf32>
    %cst_13 = arith.constant -0.457045794 : f32
    %41 = vector.broadcast %cst_13 : f32 to vector<1x256xf32>
    %42 = arith.mulf %41, %2 : vector<1x256xf32>
    %cst_14 = arith.constant 4.000000e+00 : f32
    %43 = vector.broadcast %cst_14 : f32 to vector<1x256xf32>
    %44 = arith.mulf %43, %6 : vector<1x256xf32>
    %45 = arith.subf %44, %4 : vector<1x256xf32>
    %46 = arith.subf %45, %5 : vector<1x256xf32>
    %47 = arith.mulf %42, %46 : vector<1x256xf32>
    %cst_15 = arith.constant 0.373176336 : f32
    %48 = vector.broadcast %cst_15 : f32 to vector<1x256xf32>
    %49 = arith.mulf %48, %3 : vector<1x256xf32>
    %cst_16 = arith.constant 2.000000e+00 : f32
    %50 = vector.broadcast %cst_16 : f32 to vector<1x256xf32>
    %51 = arith.mulf %50, %6 : vector<1x256xf32>
    %cst_17 = arith.constant 3.000000e+00 : f32
    %52 = vector.broadcast %cst_17 : f32 to vector<1x256xf32>
    %53 = arith.mulf %52, %4 : vector<1x256xf32>
    %54 = arith.subf %51, %53 : vector<1x256xf32>
    %cst_18 = arith.constant 3.000000e+00 : f32
    %55 = vector.broadcast %cst_18 : f32 to vector<1x256xf32>
    %56 = arith.mulf %55, %5 : vector<1x256xf32>
    %57 = arith.subf %54, %56 : vector<1x256xf32>
    %58 = arith.mulf %49, %57 : vector<1x256xf32>
    %cst_19 = arith.constant -0.457045794 : f32
    %59 = vector.broadcast %cst_19 : f32 to vector<1x256xf32>
    %60 = arith.mulf %59, %1 : vector<1x256xf32>
    %cst_20 = arith.constant 4.000000e+00 : f32
    %61 = vector.broadcast %cst_20 : f32 to vector<1x256xf32>
    %62 = arith.mulf %61, %6 : vector<1x256xf32>
    %63 = arith.subf %62, %4 : vector<1x256xf32>
    %64 = arith.subf %63, %5 : vector<1x256xf32>
    %65 = arith.mulf %60, %64 : vector<1x256xf32>
    %cst_21 = arith.constant 1.44530571 : f32
    %66 = vector.broadcast %cst_21 : f32 to vector<1x256xf32>
    %67 = arith.mulf %66, %3 : vector<1x256xf32>
    %68 = arith.subf %4, %5 : vector<1x256xf32>
    %69 = arith.mulf %67, %68 : vector<1x256xf32>
    %cst_22 = arith.constant -0.590043604 : f32
    %70 = vector.broadcast %cst_22 : f32 to vector<1x256xf32>
    %71 = arith.mulf %70, %1 : vector<1x256xf32>
    %cst_23 = arith.constant 3.000000e+00 : f32
    %72 = vector.broadcast %cst_23 : f32 to vector<1x256xf32>
    %73 = arith.mulf %72, %5 : vector<1x256xf32>
    %74 = arith.subf %4, %73 : vector<1x256xf32>
    %75 = arith.mulf %71, %74 : vector<1x256xf32>
    %76 = tpu.concatenate %10, %12, %14, %16, %18, %20, %26, %28, %31, %37, %40, %47, %58, %65, %69, %75 in 0 : vector<1x256xf32>, vector<1x256xf32>, vector<1x256xf32>, vector<1x256xf32>, vector<1x256xf32>, vector<1x256xf32>, vector<1x256xf32>, vector<1x256xf32>, vector<1x256xf32>, vector<1x256xf32>, vector<1x256xf32>, vector<1x256xf32>, vector<1x256xf32>, vector<1x256xf32>, vector<1x256xf32>, vector<1x256xf32> -> vector<16x256xf32>
    %c0_24 = arith.constant 0 : index
    %c0_25 = arith.constant 0 : index
    %77 = vector.load %arg3[%c0_24, %c0_25] : memref<32x16xf32, #tpu.memory_space<vmem>>, vector<32x16xf32>
    %c0_26 = arith.constant 0 : index
    %c0_27 = arith.constant 0 : index
    %78 = vector.load %arg1[%c0_26, %c0_27] : memref<16x256xf32, #tpu.memory_space<vmem>>, vector<16x256xf32>
    %cst_28 = arith.constant dense<0.000000e+00> : vector<32x256xf32>
    %79 = tpu.matmul %77, %78, %cst_28 {dimension_numbers = #tpu.dot_dimension_numbers<[1], [0], [0], [1], [0, 0, 1, 1], [], []>} : vector<32x16xf32>, vector<16x256xf32>, vector<32x256xf32> -> vector<32x256xf32>
    %c0_29 = arith.constant 0 : index
    %c0_30 = arith.constant 0 : index
    %80 = vector.load %arg4[%c0_29, %c0_30] : memref<32x16xf32, #tpu.memory_space<vmem>>, vector<32x16xf32>
    %cst_31 = arith.constant dense<0.000000e+00> : vector<32x256xf32>
    %81 = tpu.matmul %80, %76, %cst_31 {dimension_numbers = #tpu.dot_dimension_numbers<[1], [0], [0], [1], [0, 0, 1, 1], [], []>} : vector<32x16xf32>, vector<16x256xf32>, vector<32x256xf32> -> vector<32x256xf32>
    %82 = arith.addf %79, %81 : vector<32x256xf32>
    %cst_32 = arith.constant 0.000000e+00 : f32
    %83 = vector.broadcast %cst_32 : f32 to vector<32x256xf32>
    %84 = arith.maximumf %82, %83 : vector<32x256xf32>
    %c0_33 = arith.constant 0 : index
    %c0_34 = arith.constant 0 : index
    %85 = vector.load %arg5[%c0_33, %c0_34] : memref<32x32xf32, #tpu.memory_space<vmem>>, vector<32x32xf32>
    %cst_35 = arith.constant dense<0.000000e+00> : vector<32x256xf32>
    %86 = tpu.matmul %85, %84, %cst_35 {dimension_numbers = #tpu.dot_dimension_numbers<[1], [0], [0], [1], [0, 0, 1, 1], [], []>} : vector<32x32xf32>, vector<32x256xf32>, vector<32x256xf32> -> vector<32x256xf32>
    %cst_36 = arith.constant 0.000000e+00 : f32
    %87 = vector.broadcast %cst_36 : f32 to vector<32x256xf32>
    %88 = arith.maximumf %86, %87 : vector<32x256xf32>
    %c0_37 = arith.constant 0 : index
    %c0_38 = arith.constant 0 : index
    %89 = vector.load %arg6[%c0_37, %c0_38] : memref<3x32xf32, #tpu.memory_space<vmem>>, vector<3x32xf32>
    %cst_39 = arith.constant dense<0.000000e+00> : vector<3x256xf32>
    %90 = tpu.matmul %89, %88, %cst_39 {dimension_numbers = #tpu.dot_dimension_numbers<[1], [0], [0], [1], [0, 0, 1, 1], [], []>} : vector<3x32xf32>, vector<32x256xf32>, vector<3x256xf32> -> vector<3x256xf32>
    %91 = arith.negf %90 : vector<3x256xf32>
    %92 = math.exp %91 : vector<3x256xf32>
    %cst_40 = arith.constant 1.000000e+00 : f32
    %93 = vector.broadcast %cst_40 : f32 to vector<3x256xf32>
    %94 = arith.addf %93, %92 : vector<3x256xf32>
    %95 = arith.divf %93, %94 : vector<3x256xf32>
    %c0_41 = arith.constant 0 : index
    %c0_42 = arith.constant 0 : index
    %96 = vector.load %arg7[%c0_41, %c0_42] : memref<3x256xf32, #tpu.memory_space<vmem>>, vector<3x256xf32>
    tpu.vector_store %arg7[%c0_41, %c0_42], %95 {strides = array<i32>} : memref<3x256xf32, #tpu.memory_space<vmem>>, vector<3x256xf32>,
    return
  }
  func.func @transform_0(%arg0: i32) -> (i32, i32) {
    %c0_i32 = arith.constant 0 : i32
    %c0_i32_0 = arith.constant 0 : i32
    return %c0_i32, %arg0 : i32, i32
  }
  func.func @transform_1(%arg0: i32) -> (i32, i32) {
    %c0_i32 = arith.constant 0 : i32
    %c0_i32_0 = arith.constant 0 : i32
    return %c0_i32, %arg0 : i32, i32
  }
  func.func @transform_2(%arg0: i32) -> (i32, i32) {
    %c0_i32 = arith.constant 0 : i32
    %c0_i32_0 = arith.constant 0 : i32
    %c0_i32_1 = arith.constant 0 : i32
    return %c0_i32, %c0_i32_0 : i32, i32
  }
  func.func @transform_3(%arg0: i32) -> (i32, i32) {
    %c0_i32 = arith.constant 0 : i32
    %c0_i32_0 = arith.constant 0 : i32
    %c0_i32_1 = arith.constant 0 : i32
    return %c0_i32, %c0_i32_0 : i32, i32
  }
  func.func @transform_4(%arg0: i32) -> (i32, i32) {
    %c0_i32 = arith.constant 0 : i32
    %c0_i32_0 = arith.constant 0 : i32
    %c0_i32_1 = arith.constant 0 : i32
    return %c0_i32, %c0_i32_0 : i32, i32
  }
  func.func @transform_5(%arg0: i32) -> (i32, i32) {
    %c0_i32 = arith.constant 0 : i32
    %c0_i32_0 = arith.constant 0 : i32
    %c0_i32_1 = arith.constant 0 : i32
    return %c0_i32, %c0_i32_0 : i32, i32
  }
  func.func @transform_6(%arg0: i32) -> (i32, i32) {
    %c0_i32 = arith.constant 0 : i32
    %c0_i32_0 = arith.constant 0 : i32
    return %c0_i32, %arg0 : i32, i32
  }
}

</mosaic_0001>

<llo_original>
// kernel: tpu_custom_call.1
$region0: #{tpu_custom_call.1}
  #allocation0 [shape = 'u32[]', space=smem, size = 0x4, offset = 0x4, fixed_abs, tag = 'smem constant byte address 0x4 - core index']
  #allocation1 [shape = 'u32[144,128]{1,0:T(1,128)}', space=vmem, size = 0x12000, scoped, tag = 'internal scratch']
  %s0 = inlined_call_operand.vmem [shape: f32[16,256], index: 0, kind: input, shape index: {}]
  %s1 = inlined_call_operand.vmem [shape: f32[3,256], index: 1, kind: input, shape index: {}]
  %s2 = inlined_call_operand.vmem [shape: f32[32,16], index: 2, kind: input, shape index: {}]
  %s3 = inlined_call_operand.vmem [shape: f32[32,16], index: 3, kind: input, shape index: {}]
  %s4 = inlined_call_operand.vmem [shape: f32[32,32], index: 4, kind: input, shape index: {}]
  %s5 = inlined_call_operand.vmem [shape: f32[3,32], index: 5, kind: input, shape index: {}]
  %s6 = inlined_call_operand.hbm [shape: f32[3,256], index: 6, kind: output, shape index: {}]
  %s7 = sld [smem:[#allocation0]]
  $region34: #{tpu_custom_call.1} parent=0
    _
  %s9 = ssub.s32 1, %s7
  %s10 = scalar_select 0, %s9, %s7
  $region1: #{tpu_custom_call.1} parent=0
    #allocation2 [shape = 'u8[4096]{0}', space=vmem, size = 0x1000, scoped, tag = 'output window, operand 0, single buffered']
    #allocation3 [shape = 's32[1]{0}', space=sflag, size = 0x4, scoped, tag = 'scoped memory for tpu_custom_call.1']
    %11 = vsyncpa [#allocation3], 0
    // Predicated region
    $region2: #{tpu_custom_call.1} parent=1 // pred_check
      _
    $region3: #{tpu_custom_call.1} parent=1 // pred_check_branch
      %13 = sbr.rel (0) target = $region5
    $region4: #{tpu_custom_call.1} parent=1 // pred_region
      _
    $region5: #{tpu_custom_call.1} parent=1 // pred_fallthru
      _
    // Predicated region
    $region6: #{tpu_custom_call.1} parent=1 // pred_check
      _
    $region7: #{tpu_custom_call.1} parent=1 // pred_check_branch
      %15 = sbr.rel (0) target = $region9
    $region8: #{tpu_custom_call.1} parent=1 // pred_region
      _
    $region9: #{tpu_custom_call.1} parent=1 // pred_fallthru
      _
    // Predicated region
    $region10: #{tpu_custom_call.1} parent=1 // pred_check
      _
    $region11: #{tpu_custom_call.1} parent=1 // pred_check_branch
      %17 = sbr.rel (0) target = $region13
    $region12: #{tpu_custom_call.1} parent=1 // pred_region
      _
    $region13: #{tpu_custom_call.1} parent=1 // pred_fallthru
      _
    // Predicated region
    $region14: #{tpu_custom_call.1} parent=1 // pred_check
      _
    $region15: #{tpu_custom_call.1} parent=1 // pred_check_branch
      %19 = sbr.rel (0) target = $region17
    $region16: #{tpu_custom_call.1} parent=1 // pred_region
      _
    $region17: #{tpu_custom_call.1} parent=1 // pred_fallthru
      _
    // Predicated region
    $region18: #{tpu_custom_call.1} parent=1 // pred_check
      _
    $region19: #{tpu_custom_call.1} parent=1 // pred_check_branch
      %21 = sbr.rel (0) target = $region21
    $region20: #{tpu_custom_call.1} parent=1 // pred_region
      _
    $region21: #{tpu_custom_call.1} parent=1 // pred_fallthru
      _
    // Predicated region
    $region22: #{tpu_custom_call.1} parent=1 // pred_check
      _
    $region23: #{tpu_custom_call.1} parent=1 // pred_check_branch
      %23 = sbr.rel (0) target = $region25
    $region24: #{tpu_custom_call.1} parent=1 // pred_region
      _
    $region25: #{tpu_custom_call.1} parent=1 // pred_fallthru
      _
    %v24 = vld [vmem:[%s1] sm:$0x77]
    %v25 = vmul.f32 %v24, %v24
    %v27 = vrot.slane %v24, 5
    %v28 = vrot.slane %v27, 4
    %v30 = vmul.f32 %v24, %v28
    %v31 = vrot.slane %v24, 6
    %v32 = vrot.slane %v31, 4
    %v34 = vmul.f32 %v24, %v32
    %v35 = vmul.f32 %v24, -0.48860252
    %v36 = vmul.f32 %v24, 0.48860252
    %v37 = vmul.f32 %v30, 1.0925485
    %v38 = vmul.f32 %v30, -1.0925485
    %v39 = vmul.f32 %v25, 2.0
    %v41 = vrot.slane %v25, 6
    %v43 = vsub.f32 %v39, %v41
    %v44 = vrot.slane %v25, 7
    %v46 = vsub.f32 %v43, %v44
    %v47 = vmul.f32 %v46, 0.31539157
    %v48 = vmul.f32 %v34, -1.0925485
    %v49 = vrot.slane %v25, 5
    %v50 = vrot.slane %v49, 4
    %v52 = vsub.f32 %v25, %v50
    %v53 = vmul.f32 %v52, 0.54627424
    %v54 = vmul.f32 %v24, -0.5900436
    %v55 = vmul.f32 %v25, 3.0
    %v56 = vsub.f32 %v55, %v50
    %v58 = vrot.slane %v56, 7
    %v60 = vmul.f32 %v54, %v58
    %v61 = vmul.f32 %v30, 2.8906114
    %v62 = vmul.f32 %v61, %v32
    %v63 = vmul.f32 %v24, -0.4570458
    %v64 = vmul.f32 %v25, 4.0
    %v65 = vsub.f32 %v64, %v41
    %v66 = vsub.f32 %v65, %v44
    %v68 = vrot.slane %v66, 5
    %v69 = vrot.slane %v68, 4
    %v71 = vmul.f32 %v63, %v69
    %v72 = vmul.f32 %v24, 0.37317634
    %v74 = vrot.slane %v55, 6
    %v76 = vsub.f32 %v39, %v74
    %v77 = vrot.slane %v55, 7
    %v79 = vsub.f32 %v76, %v77
    %v80 = vmul.f32 %v72, %v79
    %v81 = vrot.slane %v66, 6
    %v82 = vrot.slane %v81, 4
    %v84 = vmul.f32 %v63, %v82
    %v85 = vmul.f32 %v24, 1.4453057
    %v87 = vrot.slane %v52, 6
    %v89 = vmul.f32 %v85, %v87
    %v90 = vrot.slane %v55, 5
    %v91 = vrot.slane %v90, 4
    %v93 = vsub.f32 %v25, %v91
    %v94 = vmul.f32 %v54, %v93
    %v96 = vlaneseq
    %v97 = vshrl.u32 %v96, 7
    %v98 = vsub.s32 1, %v97
    %v99 = vrot.slane %v35, %v98
    %v100 = vlaneseq
    %v101 = vshrl.u32 %v100, 7
    %v102 = vsub.s32 5, %v101
    %v103 = vrot.slane %v35, %v102
    %v107 = vlaneseq
    %v108 = vshrl.u32 %v107, 7
    %v109 = vsub.s32 2, %v108
    %v110 = vrot.slane %v36, %v109
    %v111 = vlaneseq
    %v112 = vshrl.u32 %v111, 7
    %v113 = vsub.s32 6, %v112
    %v114 = vrot.slane %v36, %v113
    %v117 = vlaneseq
    %v118 = vshrl.u32 %v117, 7
    %v119 = vsub.s32 0, %v118
    %v120 = vrot.slane %v35, %v119
    %v121 = vlaneseq
    %v122 = vshrl.u32 %v121, 7
    %v123 = vsub.s32 4, %v122
    %v124 = vrot.slane %v35, %v123
    %v128 = vlaneseq
    %v129 = vshrl.u32 %v128, 7
    %v130 = vsub.s32 0, %v129
    %v131 = vrot.slane %v37, %v130
    %v132 = vlaneseq
    %v133 = vshrl.u32 %v132, 7
    %v134 = vsub.s32 4, %v133
    %v135 = vrot.slane %v37, %v134
    %v139 = vlaneseq
    %v140 = vshrl.u32 %v139, 7
    %v141 = vsub.s32 1, %v140
    %v142 = vrot.slane %v38, %v141
    %v143 = vlaneseq
    %v144 = vshrl.u32 %v143, 7
    %v145 = vsub.s32 5, %v144
    %v146 = vrot.slane %v38, %v145
    %v150 = vlaneseq
    %v151 = vshrl.u32 %v150, 7
    %v152 = vsub.s32 2, %v151
    %v153 = vrot.slane %v47, %v152
    %v154 = vlaneseq
    %v155 = vshrl.u32 %v154, 7
    %v156 = vsub.s32 6, %v155
    %v157 = vrot.slane %v47, %v156
    %v161 = vlaneseq
    %v162 = vshrl.u32 %v161, 7
    %v163 = vsub.s32 0, %v162
    %v164 = vrot.slane %v48, %v163
    %v165 = vlaneseq
    %v166 = vshrl.u32 %v165, 7
    %v167 = vsub.s32 4, %v166
    %v168 = vrot.slane %v48, %v167
    %v172 = vlaneseq
    %v173 = vshrl.u32 %v172, 7
    %v174 = vsub.s32 0, %v173
    %v175 = vrot.slane %v53, %v174
    %v176 = vlaneseq
    %v177 = vshrl.u32 %v176, 7
    %v178 = vsub.s32 4, %v177
    %v179 = vrot.slane %v53, %v178
    %v183 = vlaneseq
    %v184 = vshrl.u32 %v183, 7
    %v185 = vsub.s32 1, %v184
    %v186 = vrot.slane %v60, %v185
    %v187 = vlaneseq
    %v188 = vshrl.u32 %v187, 7
    %v189 = vsub.s32 5, %v188
    %v190 = vrot.slane %v60, %v189
    %v194 = vlaneseq
    %v195 = vshrl.u32 %v194, 7
    %v196 = vsub.s32 0, %v195
    %v197 = vrot.slane %v62, %v196
    %v198 = vlaneseq
    %v199 = vshrl.u32 %v198, 7
    %v200 = vsub.s32 4, %v199
    %v201 = vrot.slane %v62, %v200
    %v205 = vlaneseq
    %v206 = vshrl.u32 %v205, 7
    %v207 = vsub.s32 1, %v206
    %v208 = vrot.slane %v71, %v207
    %v209 = vlaneseq
    %v210 = vshrl.u32 %v209, 7
    %v211 = vsub.s32 5, %v210
    %v212 = vrot.slane %v71, %v211
    %v216 = vlaneseq
    %v217 = vshrl.u32 %v216, 7
    %v218 = vsub.s32 2, %v217
    %v219 = vrot.slane %v80, %v218
    %v220 = vlaneseq
    %v221 = vshrl.u32 %v220, 7
    %v222 = vsub.s32 6, %v221
    %v223 = vrot.slane %v80, %v222
    %v227 = vlaneseq
    %v228 = vshrl.u32 %v227, 7
    %v229 = vsub.s32 0, %v228
    %v230 = vrot.slane %v84, %v229
    %v231 = vlaneseq
    %v232 = vshrl.u32 %v231, 7
    %v233 = vsub.s32 4, %v232
    %v234 = vrot.slane %v84, %v233
    %v238 = vlaneseq
    %v239 = vshrl.u32 %v238, 7
    %v240 = vsub.s32 2, %v239
    %v241 = vrot.slane %v89, %v240
    %v242 = vlaneseq
    %v243 = vshrl.u32 %v242, 7
    %v244 = vsub.s32 6, %v243
    %v245 = vrot.slane %v89, %v244
    %v249 = vlaneseq
    %v250 = vshrl.u32 %v249, 7
    %v251 = vsub.s32 0, %v250
    %v252 = vrot.slane %v94, %v251
    %v253 = vlaneseq
    %v254 = vshrl.u32 %v253, 7
    %v255 = vsub.s32 4, %v254
    %v256 = vrot.slane %v94, %v255
    %vm259 = vcmask 1040384
    %v260 = vsel %vm259, 0.2820948, %v99
    %v261 = vsel %vm259, 0.2820948, %v103
    %vm262 = vcmask 1041408
    %v263 = vsel %vm262, %v260, %v110
    %v264 = vsel %vm262, %v261, %v114
    %vm265 = vcmask 1042432
    %v266 = vsel %vm265, %v263, %v120
    %v267 = vsel %vm265, %v264, %v124
    %vm268 = vcmask 1043456
    %v269 = vsel %vm268, %v266, %v131
    %v270 = vsel %vm268, %v267, %v135
    %vm271 = vcmask 1044480
    %v272 = vsel %vm271, %v269, %v142
    %v273 = vsel %vm271, %v270, %v146
    %vm274 = vcmask 1045504
    %v275 = vsel %vm274, %v272, %v153
    %v276 = vsel %vm274, %v273, %v157
    %vm277 = vcmask 1046528
    %v278 = vsel %vm277, %v275, %v164
    %v279 = vsel %vm277, %v276, %v168
    %v280 = vsel %vm259, %v175, %v186
    %v281 = vsel %vm259, %v179, %v190
    %v282 = vsel %vm262, %v280, %v197
    %v283 = vsel %vm262, %v281, %v201
    %v284 = vsel %vm265, %v282, %v208
    %v285 = vsel %vm265, %v283, %v212
    %v286 = vsel %vm268, %v284, %v219
    %v287 = vsel %vm268, %v285, %v223
    %v288 = vsel %vm271, %v286, %v230
    %v289 = vsel %vm271, %v287, %v234
    %v290 = vsel %vm274, %v288, %v241
    %v291 = vsel %vm274, %v289, %v245
    %v292 = vsel %vm277, %v290, %v252
    %v293 = vsel %vm277, %v291, %v256
    %v294 = vld [vmem:[%s2] sm:$0xff]
    %v295 = vld [vmem:[%s2 + $0x8] sm:$0xff]
    %v296 = vld [vmem:[%s2 + $0x10] sm:$0xff]
    %v297 = vld [vmem:[%s2 + $0x18] sm:$0xff]
    %v298 = vld [vmem:[%s0] sm:$0xff]
    %v299 = vld [vmem:[%s0 + $0x8] sm:$0xff]
    %v300 = vld [vmem:[%s0 + $0x10] sm:$0xff]
    %v301 = vld [vmem:[%s0 + $0x18] sm:$0xff]
    %v302 = vld [vmem:[%s3] sm:$0xff]
    %v303 = vld [vmem:[%s3 + $0x8] sm:$0xff]
    %v304 = vld [vmem:[%s3 + $0x10] sm:$0xff]
    %v305 = vld [vmem:[%s3 + $0x18] sm:$0xff]
    %vm306 = vcmask 130048
    %v308 = vsel %vm306, %v302, 0
    %v311 = vsel %vm306, %v303, 0
    %v314 = vsel %vm306, %v304, 0
    %v317 = vsel %vm306, %v305, 0
    %319 = vmatprep.subr.mxu0 0.0
    %320 = vmatpush1.msra.mxu0 0.0
    %321 = vmatprep.subr.mxu0 0.0
    %322 = vmatpush1.msra.mxu0 0.0
    %323 = vmatprep.subr.mxu0 0.0
    %324 = vmatpush1.msra.mxu0 0.0
    %325 = vmatprep.subr.mxu0 0.0
    %326 = vmatpush1.msra.mxu0 0.0
    %327 = vmatprep.subr.mxu0 0.0
    %328 = vmatpush1.msra.mxu0 0.0
    %329 = vmatprep.subr.mxu0 0.0
    %330 = vmatpush1.msra.mxu0 0.0
    %331 = vmatprep.subr.mxu0 0.0
    %332 = vmatpush1.msra.mxu0 0.0
    %333 = vmatprep.subr.mxu0 0.0
    %334 = vmatpush1.msra.mxu0 0.0
    %335 = vmatprep.subr.mxu0 0.0
    %336 = vmatpush1.msra.mxu0 0.0
    %337 = vmatprep.subr.mxu0 0.0
    %338 = vmatpush1.msra.mxu0 0.0
    %339 = vmatprep.subr.mxu0 0.0
    %340 = vmatpush1.msra.mxu0 0.0
    %341 = vmatprep.subr.mxu0 0.0
    %342 = vmatpush1.msra.mxu0 0.0
    %343 = vmatprep.subr.mxu0 0.0
    %344 = vmatpush1.msra.mxu0 0.0
    %345 = vmatprep.subr.mxu0 0.0
    %346 = vmatpush1.msra.mxu0 0.0
    %347 = vmatprep.subr.mxu0 %v293
    %348 = vmatpush1.msra.mxu0 %v292
    %349 = vmatprep.subr.mxu0 %v279
    %350 = vmatpush1.msra.mxu0 %v278
    %351 = vmatprep.subr.mxu0 0.0
    %352 = vmatpush2.msra.mxu0 0.0
    %353 = vmatprep.subr.mxu0 0.0
    %354 = vmatpush2.msra.mxu0 0.0
    %355 = vmatprep.subr.mxu0 0.0
    %356 = vmatpush2.msra.mxu0 0.0
    %357 = vmatprep.subr.mxu0 0.0
    %358 = vmatpush2.msra.mxu0 0.0
    %359 = vmatprep.subr.mxu0 0.0
    %360 = vmatpush2.msra.mxu0 0.0
    %361 = vmatprep.subr.mxu0 0.0
    %362 = vmatpush2.msra.mxu0 0.0
    %363 = vmatprep.subr.mxu0 0.0
    %364 = vmatpush2.msra.mxu0 0.0
    %365 = vmatprep.subr.mxu0 0.0
    %366 = vmatpush2.msra.mxu0 0.0
    %367 = vmatprep.subr.mxu0 0.0
    %368 = vmatpush2.msra.mxu0 0.0
    %369 = vmatprep.subr.mxu0 0.0
    %370 = vmatpush2.msra.mxu0 0.0
    %371 = vmatprep.subr.mxu0 0.0
    %372 = vmatpush2.msra.mxu0 0.0
    %373 = vmatprep.subr.mxu0 0.0
    %374 = vmatpush2.msra.mxu0 0.0
    %375 = vmatprep.subr.mxu0 0.0
    %376 = vmatpush2.msra.mxu0 0.0
    %377 = vmatprep.subr.mxu0 0.0
    %378 = vmatpush2.msra.mxu0 0.0
    %379 = vmatprep.subr.mxu0 0.0
    %380 = vmatpush2.msra.mxu0 0.0
    %381 = vmatprep.subr.mxu0 0.0
    %382 = vmatpush2.msra.mxu0 0.0
    %383 = vmatprep.mubr.f32.mxu0 0.0
    %384 = vmatmul.mubr.f32.gmra.mxu0 %v308
    %v385 = vpop.f32.mrf.mxu0
    %v386 = vadd.f32 0.0, %v385
    %v387 = vpop.f32.mrf.mxu0
    %v388 = vadd.f32 0.0, %v387
    %389 = vmatprep.mubr.f32.mxu0 0.0
    %390 = vmatmul.mubr.f32.gmra.mxu0 %v311
    %v391 = vpop.f32.mrf.mxu0
    %v392 = vadd.f32 0.0, %v391
    %v393 = vpop.f32.mrf.mxu0
    %v394 = vadd.f32 0.0, %v393
    %395 = vmatprep.mubr.f32.mxu0 0.0
    %396 = vmatmul.mubr.f32.gmra.mxu0 %v314
    %v397 = vpop.f32.mrf.mxu0
    %v398 = vadd.f32 0.0, %v397
    %v399 = vpop.f32.mrf.mxu0
    %v400 = vadd.f32 0.0, %v399
    %401 = vmatprep.mubr.f32.mxu0 0.0
    %402 = vmatmul.mubr.f32.gmra.mxu0 %v317
    %v403 = vpop.f32.mrf.mxu0
    %v404 = vadd.f32 0.0, %v403
    %v405 = vpop.f32.mrf.mxu0
    %v406 = vadd.f32 0.0, %v405
    %407 = vdwg.mxu0
    %v409 = vsel %vm306, %v294, 0
    %v412 = vsel %vm306, %v295, 0
    %v415 = vsel %vm306, %v296, 0
    %v418 = vsel %vm306, %v297, 0
    %420 = vmatprep.subr.mxu0 0.0
    %421 = vmatpush1.msra.mxu0 0.0
    %422 = vmatprep.subr.mxu0 0.0
    %423 = vmatpush1.msra.mxu0 0.0
    %424 = vmatprep.subr.mxu0 0.0
    %425 = vmatpush1.msra.mxu0 0.0
    %426 = vmatprep.subr.mxu0 0.0
    %427 = vmatpush1.msra.mxu0 0.0
    %428 = vmatprep.subr.mxu0 0.0
    %429 = vmatpush1.msra.mxu0 0.0
    %430 = vmatprep.subr.mxu0 0.0
    %431 = vmatpush1.msra.mxu0 0.0
    %432 = vmatprep.subr.mxu0 0.0
    %433 = vmatpush1.msra.mxu0 0.0
    %434 = vmatprep.subr.mxu0 0.0
    %435 = vmatpush1.msra.mxu0 0.0
    %436 = vmatprep.subr.mxu0 0.0
    %437 = vmatpush1.msra.mxu0 0.0
    %438 = vmatprep.subr.mxu0 0.0
    %439 = vmatpush1.msra.mxu0 0.0
    %440 = vmatprep.subr.mxu0 0.0
    %441 = vmatpush1.msra.mxu0 0.0
    %442 = vmatprep.subr.mxu0 0.0
    %443 = vmatpush1.msra.mxu0 0.0
    %444 = vmatprep.subr.mxu0 0.0
    %445 = vmatpush1.msra.mxu0 0.0
    %446 = vmatprep.subr.mxu0 0.0
    %447 = vmatpush1.msra.mxu0 0.0
    %448 = vmatprep.subr.mxu0 %v301
    %449 = vmatpush1.msra.mxu0 %v300
    %450 = vmatprep.subr.mxu0 %v299
    %451 = vmatpush1.msra.mxu0 %v298
    %452 = vmatprep.subr.mxu0 0.0
    %453 = vmatpush2.msra.mxu0 0.0
    %454 = vmatprep.subr.mxu0 0.0
    %455 = vmatpush2.msra.mxu0 0.0
    %456 = vmatprep.subr.mxu0 0.0
    %457 = vmatpush2.msra.mxu0 0.0
    %458 = vmatprep.subr.mxu0 0.0
    %459 = vmatpush2.msra.mxu0 0.0
    %460 = vmatprep.subr.mxu0 0.0
    %461 = vmatpush2.msra.mxu0 0.0
    %462 = vmatprep.subr.mxu0 0.0
    %463 = vmatpush2.msra.mxu0 0.0
    %464 = vmatprep.subr.mxu0 0.0
    %465 = vmatpush2.msra.mxu0 0.0
    %466 = vmatprep.subr.mxu0 0.0
    %467 = vmatpush2.msra.mxu0 0.0
    %468 = vmatprep.subr.mxu0 0.0
    %469 = vmatpush2.msra.mxu0 0.0
    %470 = vmatprep.subr.mxu0 0.0
    %471 = vmatpush2.msra.mxu0 0.0
    %472 = vmatprep.subr.mxu0 0.0
    %473 = vmatpush2.msra.mxu0 0.0
    %474 = vmatprep.subr.mxu0 0.0
    %475 = vmatpush2.msra.mxu0 0.0
    %476 = vmatprep.subr.mxu0 0.0
    %477 = vmatpush2.msra.mxu0 0.0
    %478 = vmatprep.subr.mxu0 0.0
    %479 = vmatpush2.msra.mxu0 0.0
    %480 = vmatprep.subr.mxu0 0.0
    %481 = vmatpush2.msra.mxu0 0.0
    %482 = vmatprep.subr.mxu0 0.0
    %483 = vmatpush2.msra.mxu0 0.0
    %484 = vmatprep.mubr.f32.mxu0 0.0
    %485 = vmatmul.mubr.f32.gmra.mxu0 %v409
    %v486 = vpop.f32.mrf.mxu0
    %v487 = vadd.f32 %v386, %v486
    %v488 = vpop.f32.mrf.mxu0
    %v489 = vadd.f32 %v388, %v488
    %490 = vmatprep.mubr.f32.mxu0 0.0
    %491 = vmatmul.mubr.f32.gmra.mxu0 %v412
    %v492 = vpop.f32.mrf.mxu0
    %v493 = vadd.f32 %v392, %v492
    %v494 = vpop.f32.mrf.mxu0
    %v495 = vadd.f32 %v394, %v494
    %496 = vmatprep.mubr.f32.mxu0 0.0
    %497 = vmatmul.mubr.f32.gmra.mxu0 %v415
    %v498 = vpop.f32.mrf.mxu0
    %v499 = vadd.f32 %v398, %v498
    %v500 = vpop.f32.mrf.mxu0
    %v501 = vadd.f32 %v400, %v500
    %502 = vmatprep.mubr.f32.mxu0 0.0
    %503 = vmatmul.mubr.f32.gmra.mxu0 %v418
    %v504 = vpop.f32.mrf.mxu0
    %v505 = vadd.f32 %v404, %v504
    %v506 = vpop.f32.mrf.mxu0
    %v507 = vadd.f32 %v406, %v506
    %508 = vdwg.mxu0
    %v509 = vmax.f32 %v487, 0.0
    %v510 = vmax.f32 %v489, 0.0
    %v511 = vmax.f32 %v493, 0.0
    %v512 = vmax.f32 %v495, 0.0
    %v513 = vmax.f32 %v499, 0.0
    %v514 = vmax.f32 %v501, 0.0
    %v515 = vmax.f32 %v505, 0.0
    %v516 = vmax.f32 %v507, 0.0
    %v517 = vld [vmem:[%s4] sm:$0xff]
    %v518 = vld [vmem:[%s4 + $0x8] sm:$0xff]
    %v519 = vld [vmem:[%s4 + $0x10] sm:$0xff]
    %v520 = vld [vmem:[%s4 + $0x18] sm:$0xff]
    %vm521 = vcmask 261120
    %v523 = vsel %vm521, %v517, 0
    %v526 = vsel %vm521, %v518, 0
    %v529 = vsel %vm521, %v519, 0
    %v532 = vsel %vm521, %v520, 0
    %534 = vmatprep.subr.mxu0 0.0
    %535 = vmatpush1.msra.mxu0 0.0
    %536 = vmatprep.subr.mxu0 0.0
    %537 = vmatpush1.msra.mxu0 0.0
    %538 = vmatprep.subr.mxu0 0.0
    %539 = vmatpush1.msra.mxu0 0.0
    %540 = vmatprep.subr.mxu0 0.0
    %541 = vmatpush1.msra.mxu0 0.0
    %542 = vmatprep.subr.mxu0 0.0
    %543 = vmatpush1.msra.mxu0 0.0
    %544 = vmatprep.subr.mxu0 0.0
    %545 = vmatpush1.msra.mxu0 0.0
    %546 = vmatprep.subr.mxu0 0.0
    %547 = vmatpush1.msra.mxu0 0.0
    %548 = vmatprep.subr.mxu0 0.0
    %549 = vmatpush1.msra.mxu0 0.0
    %550 = vmatprep.subr.mxu0 0.0
    %551 = vmatpush1.msra.mxu0 0.0
    %552 = vmatprep.subr.mxu0 0.0
    %553 = vmatpush1.msra.mxu0 0.0
    %554 = vmatprep.subr.mxu0 0.0
    %555 = vmatpush1.msra.mxu0 0.0
    %556 = vmatprep.subr.mxu0 0.0
    %557 = vmatpush1.msra.mxu0 0.0
    %558 = vmatprep.subr.mxu0 %v516
    %559 = vmatpush1.msra.mxu0 %v515
    %560 = vmatprep.subr.mxu0 %v514
    %561 = vmatpush1.msra.mxu0 %v513
    %562 = vmatprep.subr.mxu0 %v512
    %563 = vmatpush1.msra.mxu0 %v511
    %564 = vmatprep.subr.mxu0 %v510
    %565 = vmatpush1.msra.mxu0 %v509
    %566 = vmatprep.subr.mxu0 0.0
    %567 = vmatpush2.msra.mxu0 0.0
    %568 = vmatprep.subr.mxu0 0.0
    %569 = vmatpush2.msra.mxu0 0.0
    %570 = vmatprep.subr.mxu0 0.0
    %571 = vmatpush2.msra.mxu0 0.0
    %572 = vmatprep.subr.mxu0 0.0
    %573 = vmatpush2.msra.mxu0 0.0
    %574 = vmatprep.subr.mxu0 0.0
    %575 = vmatpush2.msra.mxu0 0.0
    %576 = vmatprep.subr.mxu0 0.0
    %577 = vmatpush2.msra.mxu0 0.0
    %578 = vmatprep.subr.mxu0 0.0
    %579 = vmatpush2.msra.mxu0 0.0
    %580 = vmatprep.subr.mxu0 0.0
    %581 = vmatpush2.msra.mxu0 0.0
    %582 = vmatprep.subr.mxu0 0.0
    %583 = vmatpush2.msra.mxu0 0.0
    %584 = vmatprep.subr.mxu0 0.0
    %585 = vmatpush2.msra.mxu0 0.0
    %586 = vmatprep.subr.mxu0 0.0
    %587 = vmatpush2.msra.mxu0 0.0
    %588 = vmatprep.subr.mxu0 0.0
    %589 = vmatpush2.msra.mxu0 0.0
    %590 = vmatprep.subr.mxu0 0.0
    %591 = vmatpush2.msra.mxu0 0.0
    %592 = vmatprep.subr.mxu0 0.0
    %593 = vmatpush2.msra.mxu0 0.0
    %594 = vmatprep.subr.mxu0 0.0
    %595 = vmatpush2.msra.mxu0 0.0
    %596 = vmatprep.subr.mxu0 0.0
    %597 = vmatpush2.msra.mxu0 0.0
    %598 = vmatprep.mubr.f32.mxu0 0.0
    %599 = vmatmul.mubr.f32.gmra.mxu0 %v523
    %v600 = vpop.f32.mrf.mxu0
    %v601 = vadd.f32 0.0, %v600
    %v602 = vpop.f32.mrf.mxu0
    %v603 = vadd.f32 0.0, %v602
    %604 = vmatprep.mubr.f32.mxu0 0.0
    %605 = vmatmul.mubr.f32.gmra.mxu0 %v526
    %v606 = vpop.f32.mrf.mxu0
    %v607 = vadd.f32 0.0, %v606
    %v608 = vpop.f32.mrf.mxu0
    %v609 = vadd.f32 0.0, %v608
    %610 = vmatprep.mubr.f32.mxu0 0.0
    %611 = vmatmul.mubr.f32.gmra.mxu0 %v529
    %v612 = vpop.f32.mrf.mxu0
    %v613 = vadd.f32 0.0, %v612
    %v614 = vpop.f32.mrf.mxu0
    %v615 = vadd.f32 0.0, %v614
    %616 = vmatprep.mubr.f32.mxu0 0.0
    %617 = vmatmul.mubr.f32.gmra.mxu0 %v532
    %v618 = vpop.f32.mrf.mxu0
    %v619 = vadd.f32 0.0, %v618
    %v620 = vpop.f32.mrf.mxu0
    %v621 = vadd.f32 0.0, %v620
    %622 = vdwg.mxu0
    %v623 = vmax.f32 %v601, 0.0
    %v624 = vmax.f32 %v603, 0.0
    %v625 = vmax.f32 %v607, 0.0
    %v626 = vmax.f32 %v609, 0.0
    %v627 = vmax.f32 %v613, 0.0
    %v628 = vmax.f32 %v615, 0.0
    %v629 = vmax.f32 %v619, 0.0
    %v630 = vmax.f32 %v621, 0.0
    %v631 = vld [vmem:[%s5] sm:$0x7]
    %v633 = vsel %vm521, %v631, 0
    %635 = vmatprep.subr.mxu0 0.0
    %636 = vmatpush1.msra.mxu0 0.0
    %637 = vmatprep.subr.mxu0 0.0
    %638 = vmatpush1.msra.mxu0 0.0
    %639 = vmatprep.subr.mxu0 0.0
    %640 = vmatpush1.msra.mxu0 0.0
    %641 = vmatprep.subr.mxu0 0.0
    %642 = vmatpush1.msra.mxu0 0.0
    %643 = vmatprep.subr.mxu0 0.0
    %644 = vmatpush1.msra.mxu0 0.0
    %645 = vmatprep.subr.mxu0 0.0
    %646 = vmatpush1.msra.mxu0 0.0
    %647 = vmatprep.subr.mxu0 0.0
    %648 = vmatpush1.msra.mxu0 0.0
    %649 = vmatprep.subr.mxu0 0.0
    %650 = vmatpush1.msra.mxu0 0.0
    %651 = vmatprep.subr.mxu0 0.0
    %652 = vmatpush1.msra.mxu0 0.0
    %653 = vmatprep.subr.mxu0 0.0
    %654 = vmatpush1.msra.mxu0 0.0
    %655 = vmatprep.subr.mxu0 0.0
    %656 = vmatpush1.msra.mxu0 0.0
    %657 = vmatprep.subr.mxu0 0.0
    %658 = vmatpush1.msra.mxu0 0.0
    %659 = vmatprep.subr.mxu0 %v630
    %660 = vmatpush1.msra.mxu0 %v629
    %661 = vmatprep.subr.mxu0 %v628
    %662 = vmatpush1.msra.mxu0 %v627
    %663 = vmatprep.subr.mxu0 %v626
    %664 = vmatpush1.msra.mxu0 %v625
    %665 = vmatprep.subr.mxu0 %v624
    %666 = vmatpush1.msra.mxu0 %v623
    %667 = vmatprep.subr.mxu0 0.0
    %668 = vmatpush2.msra.mxu0 0.0
    %669 = vmatprep.subr.mxu0 0.0
    %670 = vmatpush2.msra.mxu0 0.0
    %671 = vmatprep.subr.mxu0 0.0
    %672 = vmatpush2.msra.mxu0 0.0
    %673 = vmatprep.subr.mxu0 0.0
    %674 = vmatpush2.msra.mxu0 0.0
    %675 = vmatprep.subr.mxu0 0.0
    %676 = vmatpush2.msra.mxu0 0.0
    %677 = vmatprep.subr.mxu0 0.0
    %678 = vmatpush2.msra.mxu0 0.0
    %679 = vmatprep.subr.mxu0 0.0
    %680 = vmatpush2.msra.mxu0 0.0
    %681 = vmatprep.subr.mxu0 0.0
    %682 = vmatpush2.msra.mxu0 0.0
    %683 = vmatprep.subr.mxu0 0.0
    %684 = vmatpush2.msra.mxu0 0.0
    %685 = vmatprep.subr.mxu0 0.0
    %686 = vmatpush2.msra.mxu0 0.0
    %687 = vmatprep.subr.mxu0 0.0
    %688 = vmatpush2.msra.mxu0 0.0
    %689 = vmatprep.subr.mxu0 0.0
    %690 = vmatpush2.msra.mxu0 0.0
    %691 = vmatprep.subr.mxu0 0.0
    %692 = vmatpush2.msra.mxu0 0.0
    %693 = vmatprep.subr.mxu0 0.0
    %694 = vmatpush2.msra.mxu0 0.0
    %695 = vmatprep.subr.mxu0 0.0
    %696 = vmatpush2.msra.mxu0 0.0
    %697 = vmatprep.subr.mxu0 0.0
    %698 = vmatpush2.msra.mxu0 0.0
    %699 = vmatprep.mubr.f32.mxu0 0.0
    %700 = vmatmul.mubr.f32.gmra.mxu0 %v633
    %v701 = vpop.f32.mrf.mxu0
    %v702 = vadd.f32 0.0, %v701
    %v703 = vpop.f32.mrf.mxu0
    %v704 = vadd.f32 0.0, %v703
    %705 = vdwg.mxu0
    %v706 = vxor.u32 %v702, 2147483648
    %v707 = vxor.u32 %v704, 2147483648
    %v708 = vmul.f32 %v706, 1.442695
    %v709 = vpow.pop %v708
    %v710 = vmul.f32 %v707, 1.442695
    %v711 = vpow.pop %v710
    %v712 = vadd.f32 %v709, 1.0
    %v713 = vadd.f32 %v711, 1.0
    %v714 = vrcp.pop %v712
    %v715 = vmul.f32 1.0, %v714
    %v716 = vrcp.pop %v713
    %v717 = vmul.f32 1.0, %v716
    %v720 = vcombine.low %v715, %v717
    %722 = vst [vmem:[#allocation2] sm:$0x77] %v720
    // Predicated region
    $region26: #{tpu_custom_call.1} parent=1 // pred_check
      _
    $region27: #{tpu_custom_call.1} parent=1 // pred_check_branch
      %724 = sbr.rel (0) target = $region29
    $region28: #{tpu_custom_call.1} parent=1 // pred_region
      %s726 = ssub.s32 128, 128
      %727 = vsyncadd [#allocation3], %s726
      %s729 = sshll.u32 [#allocation2], 4
      %s730 = int_to_ptr.vmem [resolvable:$true] %s729
      %732 = dma.vmem_to_hbm [thread:$0]  %s730, 128, %s6, [#allocation3]
    $region29: #{tpu_custom_call.1} parent=1 // pred_fallthru
      _
    // Predicated region
    $region30: #{tpu_custom_call.1} parent=1 // pred_check
      _
    $region31: #{tpu_custom_call.1} parent=1 // pred_check_branch
      %734 = sbr.rel (0) target = $region33
    $region32: #{tpu_custom_call.1} parent=1 // pred_region
      %735 = dma.done [#allocation3], 128
    $region33: #{tpu_custom_call.1} parent=1 // pred_fallthru
      _
    %736 = vsyncpa [#allocation3], 1

</llo_original>
